<compile_context>
chip_gen: v7x
topology: tpu7x:2x2x1
jax: 0.10.0
libtpu: 0.0.40
codegen_flags: <defaults>
</compile_context>

<pallas_src>
import math

import jax
import jax.numpy as jnp
from jax.experimental import pallas as pl
from jax.experimental.pallas import tpu as pltpu

# ----------------------------------------------------------------------------
# Config (synthetic, mirrors the shapes implied by TransformerClassifier.__init__)
# ----------------------------------------------------------------------------
B = 2            # batch
S = 8            # sequence length
H = 32           # base-model hidden size ("dim")
N_HEADS = 4
FFN = 64
N_LAYERS = 2     # synthetic encoder layers -> hidden_states has N_LAYERS+1 entries
LAYERS_SEL = (-1, -2)          # mopts['layers']  -> n_concat_layers = 2
POOLED_DIM = H * len(LAYERS_SEL)      # 64
PRE_CLASSIFIER = POOLED_DIM           # mopts['pre_classifier'] == 'auto' -> 64
NUM_LABELS = 8                        # training['num_labels']
VOCAB = 32
CLS_TOKEN_ID = 2
# mopts['activation'] = {'name': 'gelu_new'}
# TODO(synk): dropout is a no-op here (eval semantics); no stochastic dropout in-kernel.

# Padded kernel shapes (MXU/vreg friendly).
N_PAD = 8        # rows: one full f32 sublane group
PRE_PAD = 128    # pre_classifier lanes
OUT_PAD = 128    # classifier output lanes (lane-dense store, biggest lever)


# ----------------------------------------------------------------------------
# Pallas kernel: fused CLS gather + layer concat + pre_classifier + gelu_new
#                + classifier, all in one VMEM-resident kernel.
#   logits = gelu_new(concat(hl[cls], hp[cls]) @ W1 + b1) @ W2 + b2
# with the concat folded into two partial matmuls (W1 pre-split by layer).
# ----------------------------------------------------------------------------
def _fused_head_kernel(cls_ref, hl_ref, hp_ref, w1a_ref, w1b_ref, b1_ref,
                       w2_ref, b2_ref, out_ref, xl_buf, xp_buf):
    # Zero staging buffers so the pad rows (B..N_PAD-1) are deterministic zeros.
    xl_buf[...] = jnp.zeros_like(xl_buf)
    xp_buf[...] = jnp.zeros_like(xp_buf)

    # Gather the CLS token row of each selected layer (B is static -> unrolled).
    for b in range(B):
        cls = cls_ref[b]                                     # scalar from SMEM
        xl_buf[pl.ds(b, 1), :] = hl_ref[b, pl.ds(cls, 1), :]  # [1, H]
        xp_buf[pl.ds(b, 1), :] = hp_ref[b, pl.ds(cls, 1), :]  # [1, H]

    # pre_classifier: concat(xl, xp) @ W1 + b1 == xl @ W1[:H] + xp @ W1[H:] + b1
    # bf16 operands -> MXU bf16 path; f32 accumulation.
    xl = xl_buf[...].astype(w1a_ref.dtype)
    xp = xp_buf[...].astype(w1b_ref.dtype)
    h = (jnp.dot(xl, w1a_ref[...], preferred_element_type=jnp.float32)
         + jnp.dot(xp, w1b_ref[...], preferred_element_type=jnp.float32)
         + b1_ref[...])                                      # [N_PAD, PRE_PAD] f32

    # gelu_new(x) = 0.5*x*(1 + tanh(sqrt(2/pi)*(x + 0.044715*x^3))); f32 elementwise
    # (v5e VPU/EUP have no bf16), tanh lands on the EUP slot.
    c = math.sqrt(2.0 / math.pi)
    h = 0.5 * h * (1.0 + jnp.tanh(c * (h + 0.044715 * (h * h * h))))

    # classifier, lane-dense 128-wide output -> unmasked full-vreg stores.
    out_ref[...] = (
        jnp.dot(h.astype(w2_ref.dtype), w2_ref[...],
                preferred_element_type=jnp.float32)
        + b2_ref[...]
    ).astype(out_ref.dtype)


def classifier_head(cls_pos, h_last, h_prev, head):
    """cls_pos: [B] int32; h_last/h_prev: [B, S, H] f32; returns [B, NUM_LABELS] f32."""
    # TODO(synk): if the number of CLS rows ever grows past a few hundred, add a
    # 1-D grid over rows with BlockSpec((TILE_N, 128), ...) and
    # dimension_semantics=('parallel',); size TILE_N against v7x's 64 MiB VMEM.
    smem = pl.BlockSpec(memory_space=pltpu.MemorySpace.SMEM)
    vmem = pl.BlockSpec(memory_space=pltpu.MemorySpace.VMEM)
    out_padded = pl.pallas_call(
        _fused_head_kernel,
        out_shape=jax.ShapeDtypeStruct((N_PAD, OUT_PAD), jnp.float32),
        in_specs=[smem, vmem, vmem, vmem, vmem, vmem, vmem, vmem],
        out_specs=vmem,
        scratch_shapes=[
            pltpu.VMEM((N_PAD, H), jnp.float32),   # gathered last-layer CLS rows
            pltpu.VMEM((N_PAD, H), jnp.float32),   # gathered second-to-last rows
        ],
    )(cls_pos, h_last, h_prev,
      head["w1a"], head["w1b"], head["b1"], head["w2"], head["b2"])
    return out_padded[:B, :NUM_LABELS]


# ----------------------------------------------------------------------------
# Synthetic base model (plain-JAX glue): embeddings + 2 encoder layers.
# Produces hidden_states = (embedding_out, layer1_out, layer2_out) like
# output_hidden_states=True in HF.
# ----------------------------------------------------------------------------
def _layer_norm(x, g, b, eps=1e-12):
    mu = jnp.mean(x, axis=-1, keepdims=True)
    var = jnp.mean((x - mu) ** 2, axis=-1, keepdims=True)
    return (x - mu) * jax.lax.rsqrt(var + eps) * g + b


def _encoder_layer(x, p):
    q = x @ p["wq"] + p["bq"]
    k = x @ p["wk"] + p["bk"]
    v = x @ p["wv"] + p["bv"]
    hd = H // N_HEADS

    def split(t):  # [B,S,H] -> [B,nh,S,hd]
        return t.reshape(B, S, N_HEADS, hd).transpose(0, 2, 1, 3)

    qh, kh, vh = split(q), split(k), split(v)
    scores = jnp.einsum("bhqd,bhkd->bhqk", qh, kh) / math.sqrt(hd)
    attn = jax.nn.softmax(scores, axis=-1)
    ctx = jnp.einsum("bhqk,bhkd->bhqd", attn, vh)
    ctx = ctx.transpose(0, 2, 1, 3).reshape(B, S, H)
    attn_out = ctx @ p["wo"] + p["bo"]
    x = _layer_norm(x + attn_out, p["ln1_g"], p["ln1_b"])
    ff = jax.nn.gelu(x @ p["w_ff1"] + p["b_ff1"]) @ p["w_ff2"] + p["b_ff2"]
    x = _layer_norm(x + ff, p["ln2_g"], p["ln2_b"])
    return x


def make_params(key):
    ks = iter(jax.random.split(key, 64))

    def norm(shape, scale=0.02):
        return scale * jax.random.normal(next(ks), shape, dtype=jnp.float32)

    params = {
        "tok_emb": norm((VOCAB, H)),
        "pos_emb": norm((S, H)),
        "emb_ln_g": jnp.ones((H,), jnp.float32),
        "emb_ln_b": jnp.zeros((H,), jnp.float32),
        "layers": [],
    }
    for _ in range(N_LAYERS):
        params["layers"].append(
            {
                "wq": norm((H, H)), "bq": jnp.zeros((H,), jnp.float32),
                "wk": norm((H, H)), "bk": jnp.zeros((H,), jnp.float32),
                "wv": norm((H, H)), "bv": jnp.zeros((H,), jnp.float32),
                "wo": norm((H, H)), "bo": jnp.zeros((H,), jnp.float32),
                "ln1_g": jnp.ones((H,), jnp.float32),
                "ln1_b": jnp.zeros((H,), jnp.float32),
                "w_ff1": norm((H, FFN)), "b_ff1": jnp.zeros((FFN,), jnp.float32),
                "w_ff2": norm((FFN, H)), "b_ff2": jnp.zeros((H,), jnp.float32),
                "ln2_g": jnp.ones((H,), jnp.float32),
                "ln2_b": jnp.zeros((H,), jnp.float32),
            }
        )

    # Head parameters.  nn.Linear weight is [out, in]; store transposed [in, out]
    # so the kernel computes x @ W + b == torch's x @ W.T + b.
    bound1 = 1.0 / math.sqrt(POOLED_DIM)
    bound2 = 1.0 / math.sqrt(PRE_CLASSIFIER)
    pre_w = jax.random.uniform(next(ks), (POOLED_DIM, PRE_CLASSIFIER),
                               jnp.float32, -bound1, bound1)
    pre_b = jax.random.uniform(next(ks), (PRE_CLASSIFIER,), jnp.float32, -bound1, bound1)
    clf_w = jax.random.uniform(next(ks), (PRE_CLASSIFIER, NUM_LABELS),
                               jnp.float32, -bound2, bound2)
    clf_b = jax.random.uniform(next(ks), (NUM_LABELS,), jnp.float32, -bound2, bound2)

    # Padded / pre-split kernel weights (built once, not per call):
    #   W1 zero-padded 64->128 lanes, split by source layer (rows 0:H = layer -1,
    #   rows H:2H = layer -2); W2 zero-padded to [128, 128]; biases [1, padded].
    w1_full = jnp.zeros((POOLED_DIM, PRE_PAD), jnp.float32)
    w1_full = w1_full.at[:, :PRE_CLASSIFIER].set(pre_w)
    w2_full = jnp.zeros((PRE_PAD, OUT_PAD), jnp.float32)
    w2_full = w2_full.at[:PRE_CLASSIFIER, :NUM_LABELS].set(clf_w)
    params["head"] = {
        "w1a": w1_full[:H, :].astype(jnp.bfloat16),        # pairs with hidden[-1]
        "w1b": w1_full[H:2 * H, :].astype(jnp.bfloat16),   # pairs with hidden[-2]
        "b1": jnp.zeros((1, PRE_PAD), jnp.float32).at[0, :PRE_CLASSIFIER].set(pre_b),
        "w2": w2_full.astype(jnp.bfloat16),
        "b2": jnp.zeros((1, OUT_PAD), jnp.float32).at[0, :NUM_LABELS].set(clf_b),
    }
    return params


def base_model_hidden_states(params, input_ids):
    x = params["tok_emb"][input_ids] + params["pos_emb"][None, :, :]
    x = _layer_norm(x, params["emb_ln_g"], params["emb_ln_b"])
    hidden_states = [x]
    for lp in params["layers"]:
        x = _encoder_layer(x, lp)
        hidden_states.append(x)
    return hidden_states  # list of [B, S, H]


# ----------------------------------------------------------------------------
# Full forward (mirrors TransformerClassifier.forward)
# ----------------------------------------------------------------------------
@jax.jit
def forward(params, input_ids):
    hidden_states = base_model_hidden_states(params, input_ids)
    h_last = hidden_states[LAYERS_SEL[0]]   # hidden_states[-1]
    h_prev = hidden_states[LAYERS_SEL[1]]   # hidden_states[-2]
    # output = output[torch.where(input_ids == cls_token_id)]
    # TODO(synk): torch.where supports a variable number of CLS matches per row;
    # dynamic-shape gather is not expressible in JAX/Pallas, so we assume exactly
    # one CLS token per sequence (standard BERT convention -> N_cls == B).  Note
    # argmax returns 0 for a row with no CLS token; callers must guarantee one.
    cls_pos = jnp.argmax(input_ids == CLS_TOKEN_ID, axis=1).astype(jnp.int32)  # [B]
    # Fused Pallas head: CLS gather + layer concat + pre_classifier -> gelu_new
    # -> (dropout=identity) -> classifier.
    return classifier_head(cls_pos, h_last, h_prev, params["head"])  # [B, NUM_LABELS]


# Pure-JAX reference of the head path (same bf16-quantized weights) for a
# correctness check of the fused kernel.
def reference_forward(params, input_ids):
    hidden_states = base_model_hidden_states(params, input_ids)
    output = jnp.concatenate([hidden_states[i] for i in LAYERS_SEL], axis=-1)
    cls_pos = jnp.argmax(input_ids == CLS_TOKEN_ID, axis=1)
    x = output[jnp.arange(B), cls_pos]                     # [B, POOLED_DIM]
    hp = params["head"]
    xl = x[:, :H].astype(jnp.bfloat16)
    xp = x[:, H:].astype(jnp.bfloat16)
    h = (jnp.dot(xl, hp["w1a"], preferred_element_type=jnp.float32)
         + jnp.dot(xp, hp["w1b"], preferred_element_type=jnp.float32)
         + hp["b1"])
    c = math.sqrt(2.0 / math.pi)
    h = 0.5 * h * (1.0 + jnp.tanh(c * (h + 0.044715 * (h * h * h))))
    logits = (jnp.dot(h.astype(jnp.bfloat16), hp["w2"],
                      preferred_element_type=jnp.float32) + hp["b2"])
    return logits[:, :NUM_LABELS]


if __name__ == "__main__":
    key = jax.random.PRNGKey(0)
    pkey, ikey = jax.random.split(key)
    params = make_params(pkey)

    # Deterministic input_ids with exactly one CLS token per row, at different
    # positions so the in-kernel gather is actually exercised.
    cls_positions = jnp.array([0, 3], dtype=jnp.int32)
    content = jax.random.randint(ikey, (B, S), 4, VOCAB, dtype=jnp.int32)
    input_ids = content.at[jnp.arange(B), cls_positions].set(CLS_TOKEN_ID)  # [B, S]

    logits = forward(params, input_ids)
    jax.block_until_ready(logits)
    assert logits.shape == (B, NUM_LABELS)
    assert bool(jnp.all(jnp.isfinite(logits)))

    ref = reference_forward(params, input_ids)
    assert bool(jnp.allclose(logits, ref, atol=5e-2, rtol=5e-2))

    print("KERNEL_OK")
</pallas_src>

<mosaic_0001>
module attributes {stable_mosaic.version = 11 : i64} {
  func.func @_fused_head_kernel(%arg0: memref<2xi32, #tpu.memory_space<smem>>, %arg1: memref<2x8x32xf32, #tpu.memory_space<vmem>>, %arg2: memref<2x8x32xf32, #tpu.memory_space<vmem>>, %arg3: memref<32x128xbf16, #tpu.memory_space<vmem>>, %arg4: memref<32x128xbf16, #tpu.memory_space<vmem>>, %arg5: memref<1x128xf32, #tpu.memory_space<vmem>>, %arg6: memref<128x128xbf16, #tpu.memory_space<vmem>>, %arg7: memref<1x128xf32, #tpu.memory_space<vmem>>, %arg8: memref<8x128xf32, #tpu.memory_space<vmem>>, %arg9: memref<8x32xf32, #tpu.memory_space<vmem>>, %arg10: memref<8x32xf32, #tpu.memory_space<vmem>>) attributes {dimension_semantics = [], scalar_prefetch = 0 : i64, scratch_operands = 2 : i64, tpu.core_type = #tpu.core_type<tc>} {
    %cst = arith.constant 0.000000e+00 : f32
    %0 = vector.broadcast %cst : f32 to vector<8x32xf32>
    %c0 = arith.constant 0 : index
    %c0_0 = arith.constant 0 : index
    %1 = vector.load %arg9[%c0, %c0_0] : memref<8x32xf32, #tpu.memory_space<vmem>>, vector<8x32xf32>
    tpu.vector_store %arg9[%c0, %c0_0], %0 {strides = array<i32>} : memref<8x32xf32, #tpu.memory_space<vmem>>, vector<8x32xf32>,
    %cst_1 = arith.constant 0.000000e+00 : f32
    %2 = vector.broadcast %cst_1 : f32 to vector<8x32xf32>
    %c0_2 = arith.constant 0 : index
    %c0_3 = arith.constant 0 : index
    %3 = vector.load %arg10[%c0_2, %c0_3] : memref<8x32xf32, #tpu.memory_space<vmem>>, vector<8x32xf32>
    tpu.vector_store %arg10[%c0_2, %c0_3], %2 {strides = array<i32>} : memref<8x32xf32, #tpu.memory_space<vmem>>, vector<8x32xf32>,
    %c0_4 = arith.constant 0 : index
    %4 = memref.load %arg0[%c0_4] : memref<2xi32, #tpu.memory_space<smem>>
    %c0_5 = arith.constant 0 : index
    %5 = arith.index_cast %4 : i32 to index
    %c0_6 = arith.constant 0 : index
    %6 = vector.load %arg1[%c0_5, %5, %c0_6] : memref<2x8x32xf32, #tpu.memory_space<vmem>>, vector<1x1x32xf32>
    %7 = vector.shape_cast %6 : vector<1x1x32xf32> to vector<1x32xf32>
    %c0_7 = arith.constant 0 : index
    %c0_8 = arith.constant 0 : index
    %8 = vector.load %arg9[%c0_7, %c0_8] : memref<8x32xf32, #tpu.memory_space<vmem>>, vector<1x32xf32>
    tpu.vector_store %arg9[%c0_7, %c0_8], %7 {strides = array<i32>} : memref<8x32xf32, #tpu.memory_space<vmem>>, vector<1x32xf32>,
    %c0_9 = arith.constant 0 : index
    %9 = arith.index_cast %4 : i32 to index
    %c0_10 = arith.constant 0 : index
    %10 = vector.load %arg2[%c0_9, %9, %c0_10] : memref<2x8x32xf32, #tpu.memory_space<vmem>>, vector<1x1x32xf32>
    %11 = vector.shape_cast %10 : vector<1x1x32xf32> to vector<1x32xf32>
    %c0_11 = arith.constant 0 : index
    %c0_12 = arith.constant 0 : index
    %12 = vector.load %arg10[%c0_11, %c0_12] : memref<8x32xf32, #tpu.memory_space<vmem>>, vector<1x32xf32>
    tpu.vector_store %arg10[%c0_11, %c0_12], %11 {strides = array<i32>} : memref<8x32xf32, #tpu.memory_space<vmem>>, vector<1x32xf32>,
    %c1 = arith.constant 1 : index
    %13 = memref.load %arg0[%c1] : memref<2xi32, #tpu.memory_space<smem>>
    %c1_13 = arith.constant 1 : index
    %14 = arith.index_cast %13 : i32 to index
    %c0_14 = arith.constant 0 : index
    %15 = vector.load %arg1[%c1_13, %14, %c0_14] : memref<2x8x32xf32, #tpu.memory_space<vmem>>, vector<1x1x32xf32>
    %16 = vector.shape_cast %15 : vector<1x1x32xf32> to vector<1x32xf32>
    %c1_15 = arith.constant 1 : index
    %c0_16 = arith.constant 0 : index
    %17 = vector.load %arg9[%c1_15, %c0_16] : memref<8x32xf32, #tpu.memory_space<vmem>>, vector<1x32xf32>
    tpu.vector_store %arg9[%c1_15, %c0_16], %16 {strides = array<i32>} : memref<8x32xf32, #tpu.memory_space<vmem>>, vector<1x32xf32>,
    %c1_17 = arith.constant 1 : index
    %18 = arith.index_cast %13 : i32 to index
    %c0_18 = arith.constant 0 : index
    %19 = vector.load %arg2[%c1_17, %18, %c0_18] : memref<2x8x32xf32, #tpu.memory_space<vmem>>, vector<1x1x32xf32>
    %20 = vector.shape_cast %19 : vector<1x1x32xf32> to vector<1x32xf32>
    %c1_19 = arith.constant 1 : index
    %c0_20 = arith.constant 0 : index
    %21 = vector.load %arg10[%c1_19, %c0_20] : memref<8x32xf32, #tpu.memory_space<vmem>>, vector<1x32xf32>
    tpu.vector_store %arg10[%c1_19, %c0_20], %20 {strides = array<i32>} : memref<8x32xf32, #tpu.memory_space<vmem>>, vector<1x32xf32>,
    %c0_21 = arith.constant 0 : index
    %c0_22 = arith.constant 0 : index
    %22 = vector.load %arg9[%c0_21, %c0_22] : memref<8x32xf32, #tpu.memory_space<vmem>>, vector<8x32xf32>
    %23 = arith.truncf %22 : vector<8x32xf32> to vector<8x32xbf16>
    %c0_23 = arith.constant 0 : index
    %c0_24 = arith.constant 0 : index
    %24 = vector.load %arg10[%c0_23, %c0_24] : memref<8x32xf32, #tpu.memory_space<vmem>>, vector<8x32xf32>
    %25 = arith.truncf %24 : vector<8x32xf32> to vector<8x32xbf16>
    %c0_25 = arith.constant 0 : index
    %c0_26 = arith.constant 0 : index
    %26 = vector.load %arg3[%c0_25, %c0_26] : memref<32x128xbf16, #tpu.memory_space<vmem>>, vector<32x128xbf16>
    %cst_27 = arith.constant dense<0.000000e+00> : vector<8x128xf32>
    %27 = tpu.matmul %23, %26, %cst_27 {dimension_numbers = #tpu.dot_dimension_numbers<[1], [0], [0], [1], [0, 0, 1, 1], [], []>} : vector<8x32xbf16>, vector<32x128xbf16>, vector<8x128xf32> -> vector<8x128xf32>
    %c0_28 = arith.constant 0 : index
    %c0_29 = arith.constant 0 : index
    %28 = vector.load %arg4[%c0_28, %c0_29] : memref<32x128xbf16, #tpu.memory_space<vmem>>, vector<32x128xbf16>
    %cst_30 = arith.constant dense<0.000000e+00> : vector<8x128xf32>
    %29 = tpu.matmul %25, %28, %cst_30 {dimension_numbers = #tpu.dot_dimension_numbers<[1], [0], [0], [1], [0, 0, 1, 1], [], []>} : vector<8x32xbf16>, vector<32x128xbf16>, vector<8x128xf32> -> vector<8x128xf32>
    %30 = arith.addf %27, %29 : vector<8x128xf32>
    %c0_31 = arith.constant 0 : index
    %c0_32 = arith.constant 0 : index
    %31 = vector.load %arg5[%c0_31, %c0_32] : memref<1x128xf32, #tpu.memory_space<vmem>>, vector<1x128xf32>
    %32 = vector.broadcast %31 : vector<1x128xf32> to vector<8x128xf32>
    %33 = arith.addf %30, %32 : vector<8x128xf32>
    %cst_33 = arith.constant 5.000000e-01 : f32
    %34 = vector.broadcast %cst_33 : f32 to vector<8x128xf32>
    %35 = arith.mulf %34, %33 : vector<8x128xf32>
    %36 = arith.mulf %33, %33 : vector<8x128xf32>
    %37 = arith.mulf %36, %33 : vector<8x128xf32>
    %cst_34 = arith.constant 4.471500e-02 : f32
    %38 = vector.broadcast %cst_34 : f32 to vector<8x128xf32>
    %39 = arith.mulf %38, %37 : vector<8x128xf32>
    %40 = arith.addf %33, %39 : vector<8x128xf32>
    %cst_35 = arith.constant 0.797884583 : f32
    %41 = vector.broadcast %cst_35 : f32 to vector<8x128xf32>
    %42 = arith.mulf %41, %40 : vector<8x128xf32>
    %43 = math.tanh %42 : vector<8x128xf32>
    %cst_36 = arith.constant 1.000000e+00 : f32
    %44 = vector.broadcast %cst_36 : f32 to vector<8x128xf32>
    %45 = arith.addf %44, %43 : vector<8x128xf32>
    %46 = arith.mulf %35, %45 : vector<8x128xf32>
    %47 = arith.truncf %46 : vector<8x128xf32> to vector<8x128xbf16>
    %c0_37 = arith.constant 0 : index
    %c0_38 = arith.constant 0 : index
    %48 = vector.load %arg6[%c0_37, %c0_38] : memref<128x128xbf16, #tpu.memory_space<vmem>>, vector<128x128xbf16>
    %cst_39 = arith.constant dense<0.000000e+00> : vector<8x128xf32>
    %49 = tpu.matmul %47, %48, %cst_39 {dimension_numbers = #tpu.dot_dimension_numbers<[1], [0], [0], [1], [0, 0, 1, 1], [], []>} : vector<8x128xbf16>, vector<128x128xbf16>, vector<8x128xf32> -> vector<8x128xf32>
    %c0_40 = arith.constant 0 : index
    %c0_41 = arith.constant 0 : index
    %50 = vector.load %arg7[%c0_40, %c0_41] : memref<1x128xf32, #tpu.memory_space<vmem>>, vector<1x128xf32>
    %51 = vector.broadcast %50 : vector<1x128xf32> to vector<8x128xf32>
    %52 = arith.addf %49, %51 : vector<8x128xf32>
    %c0_42 = arith.constant 0 : index
    %c0_43 = arith.constant 0 : index
    %53 = vector.load %arg8[%c0_42, %c0_43] : memref<8x128xf32, #tpu.memory_space<vmem>>, vector<8x128xf32>
    tpu.vector_store %arg8[%c0_42, %c0_43], %52 {strides = array<i32>} : memref<8x128xf32, #tpu.memory_space<vmem>>, vector<8x128xf32>,
    return
  }
}

</mosaic_0001>

<llo_original>
// kernel: forward.1
$region0: #{forward.1}
  #allocation0 [shape = 'u32[]', space=smem, size = 0x4, offset = 0x4, fixed_abs, tag = 'smem constant byte address 0x4 - core index']
  #allocation1 [shape = 'u32[144,128]{1,0:T(1,128)}', space=vmem, size = 0x12000, scoped, tag = 'internal scratch']
  #allocation2 [shape = 'f32[8,32]{1,0:T(8,128)}', space=vmem, size = 0x1000, scoped, tag = 'scratch operand']
  #allocation3 [shape = 'f32[8,32]{1,0:T(8,128)}', space=vmem, size = 0x1000, scoped, tag = 'scratch operand']
  %s0 = inlined_call_operand.vmem [shape: s32[2], index: 0, kind: input, shape index: {}]
  %s1 = inlined_call_operand.vmem [shape: f32[2,8,32], index: 1, kind: input, shape index: {}]
  %s2 = inlined_call_operand.vmem [shape: f32[2,8,32], index: 2, kind: input, shape index: {}]
  %s3 = inlined_call_operand.vmem [shape: bf16[32,128], index: 3, kind: input, shape index: {}]
  %s4 = inlined_call_operand.vmem [shape: bf16[32,128], index: 4, kind: input, shape index: {}]
  %s5 = inlined_call_operand.vmem [shape: f32[1,128], index: 5, kind: input, shape index: {}]
  %s6 = inlined_call_operand.vmem [shape: bf16[128,128], index: 6, kind: input, shape index: {}]
  %s7 = inlined_call_operand.vmem [shape: f32[1,128], index: 7, kind: input, shape index: {}]
  %s8 = inlined_call_operand.vmem [shape: f32[8,128], index: 8, kind: output, shape index: {}]
  %s9 = sld [smem:[#allocation0]]
  $region46: #{forward.1} parent=0
    _
  %s11 = ssub.s32 1, %s9
  %s12 = scalar_select 0, %s11, %s9
  $region1: #{forward.1} parent=0
    #allocation4 [shape = 'u8[512]{0}', space=smem, size = 0x200, scoped, tag = 'input window, operand 0, single buffered']
    #allocation5 [shape = 's32[1]{0}', space=sflag, size = 0x4, scoped, tag = 'scoped memory for forward.1']
    %13 = vsyncpa [#allocation5], 0
    // Predicated region
    $region2: #{forward.1} parent=1 // pred_check
      _
    $region3: #{forward.1} parent=1 // pred_check_branch
      %15 = sbr.rel (0) target = $region5
    $region4: #{forward.1} parent=1 // pred_region
      %s17 = ssub.s32 16, 16
      %18 = vsyncadd [#allocation5], %s17
      %s20 = sshll.u32 %s0, 4
      %s21 = int_to_ptr.vmem [resolvable:$true] %s20
      %23 = dma.vmem_to_smem %s21, 16, [#allocation4], [#allocation5]
    $region5: #{forward.1} parent=1 // pred_fallthru
      _
    // Predicated region
    $region6: #{forward.1} parent=1 // pred_check
      _
    $region7: #{forward.1} parent=1 // pred_check_branch
      %25 = sbr.rel (0) target = $region9
    $region8: #{forward.1} parent=1 // pred_region
      _
    $region9: #{forward.1} parent=1 // pred_fallthru
      _
    // Predicated region
    $region10: #{forward.1} parent=1 // pred_check
      _
    $region11: #{forward.1} parent=1 // pred_check_branch
      %27 = sbr.rel (0) target = $region13
    $region12: #{forward.1} parent=1 // pred_region
      _
    $region13: #{forward.1} parent=1 // pred_fallthru
      _
    // Predicated region
    $region14: #{forward.1} parent=1 // pred_check
      _
    $region15: #{forward.1} parent=1 // pred_check_branch
      %29 = sbr.rel (0) target = $region17
    $region16: #{forward.1} parent=1 // pred_region
      _
    $region17: #{forward.1} parent=1 // pred_fallthru
      _
    // Predicated region
    $region18: #{forward.1} parent=1 // pred_check
      _
    $region19: #{forward.1} parent=1 // pred_check_branch
      %31 = sbr.rel (0) target = $region21
    $region20: #{forward.1} parent=1 // pred_region
      _
    $region21: #{forward.1} parent=1 // pred_fallthru
      _
    // Predicated region
    $region22: #{forward.1} parent=1 // pred_check
      _
    $region23: #{forward.1} parent=1 // pred_check_branch
      %33 = sbr.rel (0) target = $region25
    $region24: #{forward.1} parent=1 // pred_region
      _
    $region25: #{forward.1} parent=1 // pred_fallthru
      _
    // Predicated region
    $region26: #{forward.1} parent=1 // pred_check
      _
    $region27: #{forward.1} parent=1 // pred_check_branch
      %35 = sbr.rel (0) target = $region29
    $region28: #{forward.1} parent=1 // pred_region
      _
    $region29: #{forward.1} parent=1 // pred_fallthru
      _
    // Predicated region
    $region30: #{forward.1} parent=1 // pred_check
      _
    $region31: #{forward.1} parent=1 // pred_check_branch
      %37 = sbr.rel (0) target = $region33
    $region32: #{forward.1} parent=1 // pred_region
      _
    $region33: #{forward.1} parent=1 // pred_fallthru
      _
    // Predicated region
    $region34: #{forward.1} parent=1 // pred_check
      _
    $region35: #{forward.1} parent=1 // pred_check_branch
      %39 = sbr.rel (0) target = $region37
    $region36: #{forward.1} parent=1 // pred_region
      %40 = dma.done [#allocation5], 16
    $region37: #{forward.1} parent=1 // pred_fallthru
      _
    %41 = sfence
    %vm43 = vcmask 261120
    %44 = vst.msk [vmem:[#allocation2] sm:$0xff] %vm43, 0.0
    %45 = vst.msk [vmem:[#allocation3] sm:$0xff] %vm43, 0.0
    %s46 = sld [smem:[#allocation4]]
    %s47 = scalar_lea.vmem %s1, %s46
    %v48 = vld [vmem:[%s47] sm:$0x1]
    %vm49 = vcmask 253952
    %50 = vst.msk [vmem:[#allocation2] sm:$0x1] %vm49, %v48
    %s51 = scalar_lea.vmem %s2, %s46
    %v52 = vld [vmem:[%s51] sm:$0x1]
    %53 = vst.msk [vmem:[#allocation3] sm:$0x1] %vm49, %v52
    %s54 = sld [smem:[#allocation4 + $0x1]]
    %s55 = sadd.s32 %s54, 8
    %s56 = scalar_lea.vmem %s1, %s55
    %v57 = vld [vmem:[%s56] sm:$0x1]
    %58 = vst.msk [vmem:[#allocation2 + $0x1] sm:$0x1] %vm49, %v57
    %s59 = scalar_lea.vmem %s2, %s55
    %v60 = vld [vmem:[%s59] sm:$0x1]
    %61 = vst.msk [vmem:[#allocation3 + $0x1] sm:$0x1] %vm49, %v60
    %v62 = vld [vmem:[#allocation2] sm:$0xff]
    %v63 = vpack.c.bf16 %v62, %v62
    %v64 = vld [vmem:[#allocation3] sm:$0xff]
    %v65 = vpack.c.bf16 %v64, %v64
    %v66 = vld [vmem:[%s3] sm:$0xf]
    %v67 = vld [vmem:[%s3 + $0x4] sm:$0xf]
    %v68 = vld [vmem:[%s3 + $0x8] sm:$0xf]
    %v69 = vld [vmem:[%s3 + $0xc] sm:$0xf]
    %v70 = vld [vmem:[%s4] sm:$0xf]
    %v71 = vld [vmem:[%s4 + $0x4] sm:$0xf]
    %v72 = vld [vmem:[%s4 + $0x8] sm:$0xf]
    %v73 = vld [vmem:[%s4 + $0xc] sm:$0xf]
    %v78 = vunpack.c.l.b16 %v70
    %v79 = vunpack.c.l.b16 %v71
    %v80 = vunpack.c.l.b16 %v72
    %v81 = vunpack.c.l.b16 %v73
    %v82 = vpack.c.b16 %v79, %v78
    %v83 = vpack.c.b16 %v81, %v80
    %v87 = vsel %vm43, %v65, 0
    %89 = vmatprep.subr.bf16.mxu0 0
    %90 = vmatpush1.bf16.msra.mxu0 %v82
    %91 = vmatprep.subr.bf16.mxu0 0
    %92 = vmatpush1.bf16.msra.mxu0 %v83
    %93 = vmatprep.subr.bf16.mxu0 0
    %94 = vmatpush1.bf16.msra.mxu0 0
    %95 = vmatprep.subr.bf16.mxu0 0
    %96 = vmatpush1.bf16.msra.mxu0 0
    %97 = vmatprep.subr.bf16.mxu0 0
    %98 = vmatpush1.bf16.msra.mxu0 0
    %99 = vmatprep.subr.bf16.mxu0 0
    %100 = vmatpush1.bf16.msra.mxu0 0
    %101 = vmatprep.subr.bf16.mxu0 0
    %102 = vmatpush1.bf16.msra.mxu0 0
    %103 = vmatprep.subr.bf16.mxu0 0
    %104 = vmatpush1.bf16.msra.mxu0 0
    %105 = vmatprep.subr.bf16.mxu0 0
    %106 = vmatpush1.bf16.msra.mxu0 0
    %107 = vmatprep.subr.bf16.mxu0 0
    %108 = vmatpush1.bf16.msra.mxu0 0
    %109 = vmatprep.subr.bf16.mxu0 0
    %110 = vmatpush1.bf16.msra.mxu0 0
    %111 = vmatprep.subr.bf16.mxu0 0
    %112 = vmatpush1.bf16.msra.mxu0 0
    %113 = vmatprep.subr.bf16.mxu0 0
    %114 = vmatpush1.bf16.msra.mxu0 0
    %115 = vmatprep.subr.bf16.mxu0 0
    %116 = vmatpush1.bf16.msra.mxu0 0
    %117 = vmatprep.subr.bf16.mxu0 0
    %118 = vmatpush1.bf16.msra.mxu0 0
    %119 = vmatprep.subr.bf16.mxu0 0
    %120 = vmatpush1.bf16.msra.mxu0 0
    %121 = vmatprep.mubr.bf16.mxu0 0
    %122 = vmatmul.mubr.bf16.gmra.mrb[0].mxu0 %v87
    %v123 = vpop.f32.mrb[0].mxu0
    %v124 = vadd.f32 0.0, %v123
    %v125 = vpop.f32.mrb[0].mxu0
    %v126 = vpop.f32.mrb[0].mxu0
    %v127 = vpop.f32.mrb[0].mxu0
    %128 = vdwg.mxu0
    %v133 = vunpack.c.l.b16 %v66
    %v134 = vunpack.c.l.b16 %v67
    %v135 = vunpack.c.l.b16 %v68
    %v136 = vunpack.c.l.b16 %v69
    %v137 = vpack.c.b16 %v134, %v133
    %v138 = vpack.c.b16 %v136, %v135
    %v142 = vsel %vm43, %v63, 0
    %144 = vmatprep.subr.bf16.mxu0 0
    %145 = vmatpush1.bf16.msra.mxu0 %v137
    %146 = vmatprep.subr.bf16.mxu0 0
    %147 = vmatpush1.bf16.msra.mxu0 %v138
    %148 = vmatprep.subr.bf16.mxu0 0
    %149 = vmatpush1.bf16.msra.mxu0 0
    %150 = vmatprep.subr.bf16.mxu0 0
    %151 = vmatpush1.bf16.msra.mxu0 0
    %152 = vmatprep.subr.bf16.mxu0 0
    %153 = vmatpush1.bf16.msra.mxu0 0
    %154 = vmatprep.subr.bf16.mxu0 0
    %155 = vmatpush1.bf16.msra.mxu0 0
    %156 = vmatprep.subr.bf16.mxu0 0
    %157 = vmatpush1.bf16.msra.mxu0 0
    %158 = vmatprep.subr.bf16.mxu0 0
    %159 = vmatpush1.bf16.msra.mxu0 0
    %160 = vmatprep.subr.bf16.mxu0 0
    %161 = vmatpush1.bf16.msra.mxu0 0
    %162 = vmatprep.subr.bf16.mxu0 0
    %163 = vmatpush1.bf16.msra.mxu0 0
    %164 = vmatprep.subr.bf16.mxu0 0
    %165 = vmatpush1.bf16.msra.mxu0 0
    %166 = vmatprep.subr.bf16.mxu0 0
    %167 = vmatpush1.bf16.msra.mxu0 0
    %168 = vmatprep.subr.bf16.mxu0 0
    %169 = vmatpush1.bf16.msra.mxu0 0
    %170 = vmatprep.subr.bf16.mxu0 0
    %171 = vmatpush1.bf16.msra.mxu0 0
    %172 = vmatprep.subr.bf16.mxu0 0
    %173 = vmatpush1.bf16.msra.mxu0 0
    %174 = vmatprep.subr.bf16.mxu0 0
    %175 = vmatpush1.bf16.msra.mxu0 0
    %176 = vmatprep.mubr.bf16.mxu0 0
    %177 = vmatmul.mubr.bf16.gmra.mrb[0].mxu0 %v142
    %v178 = vpop.f32.mrb[0].mxu0
    %v179 = vadd.f32 %v124, %v178
    %v180 = vpop.f32.mrb[0].mxu0
    %v181 = vpop.f32.mrb[0].mxu0
    %v182 = vpop.f32.mrb[0].mxu0
    %183 = vdwg.mxu0
    %v184 = vld [vmem:[%s5] sm:$0x1]
    %v186 = vlaneseq
    %v187 = vshrl.u32 %v186, 7
    %v188 = vsub.s32 0, %v187
    %v189 = vrot.slane %v184, %v188
    %v191 = vadd.f32 %v179, %v189
    %v192 = vmul.f32 %v191, 0.5
    %v193 = vmul.f32 %v191, %v191
    %v194 = vmul.f32 %v193, %v191
    %v195 = vmul.f32 %v194, 0.044715
    %v196 = vadd.f32 %v191, %v195
    %v197 = vmul.f32 %v196, 0.7978846
    %v198 = vtanh.pop %v197
    %v199 = vadd.f32 %v198, 1.0
    %v200 = vmul.f32 %v192, %v199
    %v201 = vpack.c.bf16 %v200, %v200
    %v202 = vld [vmem:[%s6] sm:$0xf]
    %v203 = vld [vmem:[%s6 + $0x4] sm:$0xf]
    %v204 = vld [vmem:[%s6 + $0x8] sm:$0xf]
    %v205 = vld [vmem:[%s6 + $0xc] sm:$0xf]
    %v206 = vld [vmem:[%s6 + $0x10] sm:$0xf]
    %v207 = vld [vmem:[%s6 + $0x14] sm:$0xf]
    %v208 = vld [vmem:[%s6 + $0x18] sm:$0xf]
    %v209 = vld [vmem:[%s6 + $0x1c] sm:$0xf]
    %v210 = vld [vmem:[%s6 + $0x20] sm:$0xf]
    %v211 = vld [vmem:[%s6 + $0x24] sm:$0xf]
    %v212 = vld [vmem:[%s6 + $0x28] sm:$0xf]
    %v213 = vld [vmem:[%s6 + $0x2c] sm:$0xf]
    %v214 = vld [vmem:[%s6 + $0x30] sm:$0xf]
    %v215 = vld [vmem:[%s6 + $0x34] sm:$0xf]
    %v216 = vld [vmem:[%s6 + $0x38] sm:$0xf]
    %v217 = vld [vmem:[%s6 + $0x3c] sm:$0xf]
    %v218 = vld [vmem:[%s7] sm:$0x1]
    %v220 = vlaneseq
    %v221 = vshrl.u32 %v220, 7
    %v222 = vsub.s32 0, %v221
    %v223 = vrot.slane %v218, %v222
    %v241 = vunpack.c.l.b16 %v202
    %v242 = vunpack.c.l.b16 %v203
    %v243 = vunpack.c.l.b16 %v204
    %v244 = vunpack.c.l.b16 %v205
    %v245 = vunpack.c.l.b16 %v206
    %v246 = vunpack.c.l.b16 %v207
    %v247 = vunpack.c.l.b16 %v208
    %v248 = vunpack.c.l.b16 %v209
    %v249 = vunpack.c.l.b16 %v210
    %v250 = vunpack.c.l.b16 %v211
    %v251 = vunpack.c.l.b16 %v212
    %v252 = vunpack.c.l.b16 %v213
    %v253 = vunpack.c.l.b16 %v214
    %v254 = vunpack.c.l.b16 %v215
    %v255 = vunpack.c.l.b16 %v216
    %v256 = vunpack.c.l.b16 %v217
    %v257 = vpack.c.b16 %v242, %v241
    %v258 = vpack.c.b16 %v244, %v243
    %v259 = vpack.c.b16 %v246, %v245
    %v260 = vpack.c.b16 %v248, %v247
    %v261 = vpack.c.b16 %v250, %v249
    %v262 = vpack.c.b16 %v252, %v251
    %v263 = vpack.c.b16 %v254, %v253
    %v264 = vpack.c.b16 %v256, %v255
    %273 = vmatprep.subr.bf16.mxu0 0
    %274 = vmatpush1.bf16.msra.mxu0 %v257
    %275 = vmatprep.subr.bf16.mxu0 0
    %276 = vmatpush1.bf16.msra.mxu0 %v258
    %277 = vmatprep.subr.bf16.mxu0 0
    %278 = vmatpush1.bf16.msra.mxu0 %v259
    %279 = vmatprep.subr.bf16.mxu0 0
    %280 = vmatpush1.bf16.msra.mxu0 %v260
    %281 = vmatprep.subr.bf16.mxu0 0
    %282 = vmatpush1.bf16.msra.mxu0 %v261
    %283 = vmatprep.subr.bf16.mxu0 0
    %284 = vmatpush1.bf16.msra.mxu0 %v262
    %285 = vmatprep.subr.bf16.mxu0 0
    %286 = vmatpush1.bf16.msra.mxu0 %v263
    %287 = vmatprep.subr.bf16.mxu0 0
    %288 = vmatpush1.bf16.msra.mxu0 %v264
    %289 = vmatprep.subr.bf16.mxu0 0
    %290 = vmatpush1.bf16.msra.mxu0 0
    %291 = vmatprep.subr.bf16.mxu0 0
    %292 = vmatpush1.bf16.msra.mxu0 0
    %293 = vmatprep.subr.bf16.mxu0 0
    %294 = vmatpush1.bf16.msra.mxu0 0
    %295 = vmatprep.subr.bf16.mxu0 0
    %296 = vmatpush1.bf16.msra.mxu0 0
    %297 = vmatprep.subr.bf16.mxu0 0
    %298 = vmatpush1.bf16.msra.mxu0 0
    %299 = vmatprep.subr.bf16.mxu0 0
    %300 = vmatpush1.bf16.msra.mxu0 0
    %301 = vmatprep.subr.bf16.mxu0 0
    %302 = vmatpush1.bf16.msra.mxu0 0
    %303 = vmatprep.subr.bf16.mxu0 0
    %304 = vmatpush1.bf16.msra.mxu0 0
    %305 = vmatprep.mubr.bf16.mxu0 0
    %306 = vmatmul.mubr.bf16.gmra.mrb[0].mxu0 %v201
    %v307 = vpop.f32.mrb[0].mxu0
    %v308 = vadd.f32 %v223, %v307
    %v309 = vpop.f32.mrb[0].mxu0
    %v310 = vpop.f32.mrb[0].mxu0
    %v311 = vpop.f32.mrb[0].mxu0
    %312 = vdwg.mxu0
    %313 = vst [vmem:[%s8] sm:$0xff] %v308
    // Predicated region
    $region38: #{forward.1} parent=1 // pred_check
      _
    $region39: #{forward.1} parent=1 // pred_check_branch
      %315 = sbr.rel (0) target = $region41
    $region40: #{forward.1} parent=1 // pred_region
      _
    $region41: #{forward.1} parent=1 // pred_fallthru
      _
    // Predicated region
    $region42: #{forward.1} parent=1 // pred_check
      _
    $region43: #{forward.1} parent=1 // pred_check_branch
      %317 = sbr.rel (0) target = $region45
    $region44: #{forward.1} parent=1 // pred_region
      _
    $region45: #{forward.1} parent=1 // pred_fallthru
      _
    %318 = vsyncpa [#allocation5], 1

</llo_original>
